<compile_context>
chip_gen: v7x
topology: tpu7x:2x2x1
jax: 0.10.0
libtpu: 0.0.40
codegen_flags: <defaults>
</compile_context>

<pallas_src>
import numpy as np
import jax
import jax.numpy as jnp
from jax.experimental import pallas as pl
from jax.experimental.pallas import tpu as pltpu


def _round_up(x: int, m: int) -> int:
    return (x + m - 1) // m * m


def gaus2d_pallas(params: jax.Array, size, *, out_dtype=jnp.float32) -> jax.Array:
    """params: (B, C>=3) float. Returns (B, 1, H, W) in `out_dtype` (default f32)."""
    H, W = int(size[0]), int(size[1])
    B = int(params.shape[0])
    max_size = float(max(H, W))

    # NOTE: PyTorch produces NaN grids when H == 1 or W == 1 (0/0). We guard the
    # divisor instead of reproducing the NaNs.
    gx_scale = 2.0 / float(max(H - 1, 1))
    gy_scale = 2.0 / float(max(W - 1, 1))

    # ---- tile selection --------------------------------------------------
    TARGET_BLOCK_BYTES = 1 << 20          # ~1 MiB per output block (x2 double-buffered)
    row_bytes = W * 4                     # f32 row

    # H tile: whole H if the per-batch slab is small, else multiple-of-8 chunks.
    if H * row_bytes <= TARGET_BLOCK_BYTES:
        ht = H
    else:
        ht = max(8, min(H, (TARGET_BLOCK_BYTES // row_bytes) // 8 * 8))
    H_pad = _round_up(H, ht)

    # Batch tile: whole batch if it fits (no padding, no post-call slice copy for the
    # common small case); otherwise multiples of 8 bounded by the VMEM budget.
    if B * ht * row_bytes <= TARGET_BLOCK_BYTES:
        bt = B
    else:
        max_bt = max(8, (TARGET_BLOCK_BYTES // max(1, ht * row_bytes)) // 8 * 8)
        bt = min(_round_up(B, 8), max_bt, 256)
    B_pad = _round_up(B, bt)

    grid = (B_pad // bt, H_pad // ht)

    # Parameter slab (pad with zeros only if the batch had to be padded;
    # zeros are safe: std=0 -> s=1 > 0).
    if B_pad == B:
        p3 = params[:, :3].astype(jnp.float32)
    else:
        p3 = jnp.zeros((B_pad, 3), jnp.float32).at[:B].set(
            params[:, :3].astype(jnp.float32))

    def kernel(p_ref, o_ref):
        hi = pl.program_id(1)

        p = p_ref[...]                                   # (bt, 3) f32
        x = jnp.clip(p[:, 0:1], -1.0, 1.0)               # (bt, 1)
        y = jnp.clip(p[:, 1:2], -1.0, 1.0)               # (bt, 1)
        std = jnp.clip(p[:, 2:3], 0.0, 1.0)              # (bt, 1)

        # std_x = s / H, std_y = s / W  with  s = 1 + max_size * std
        s = 1.0 + max_size * std                         # (bt, 1)
        inv_2s2 = pl.reciprocal(2.0 * s * s, approx=False)          # 1/(2 s^2)
        inv_2sx2 = (inv_2s2 * float(H * H))[:, :, None]  # (bt,1,1) == 1/(2 std_x^2)
        inv_2sy2 = (inv_2s2 * float(W * W))[:, :, None]  # (bt,1,1) == 1/(2 std_y^2)

        # Column factor over this H tile: (bt, ht, 1)
        h0 = (hi * ht).astype(jnp.float32)
        ih = jax.lax.broadcasted_iota(jnp.int32, (1, ht, 1), 1).astype(jnp.float32)
        gx = (ih + h0) * gx_scale - 1.0                  # (1, ht, 1)
        dx = gx - x[:, :, None]                          # (bt, ht, 1)
        ex = jnp.exp(-(dx * dx) * inv_2sx2)              # (bt, ht, 1)

        # Row factor: (bt, 1, W)
        iw = jax.lax.broadcasted_iota(jnp.int32, (1, 1, W), 2).astype(jnp.float32)
        gy = iw * gy_scale - 1.0                         # (1, 1, W)
        dy = gy - y[:, :, None]                          # (bt, 1, W)
        ey = jnp.exp(-(dy * dy) * inv_2sy2)              # (bt, 1, W)

        # Broadcast multiply on the VPU (a k=1 matmul would waste the MXU).
        o_ref[...] = (ex * ey).astype(o_ref.dtype)       # (bt, ht, W)

    out = pl.pallas_call(
        kernel,
        out_shape=jax.ShapeDtypeStruct((B_pad, H_pad, W), out_dtype),
        grid_spec=pltpu.PrefetchScalarGridSpec(
            num_scalar_prefetch=0,
            grid=grid,
            in_specs=[pl.BlockSpec((bt, 3), lambda bi, hi: (bi, 0))],
            out_specs=pl.BlockSpec((bt, ht, W), lambda bi, hi: (bi, hi, 0)),
        ),
        compiler_params=pltpu.CompilerParams(
            dimension_semantics=("parallel", "parallel")),
    )(p3)

    if B_pad != B or H_pad != H:
        out = out[:B, :H, :]
    return out.reshape(B, 1, H, W)


def gaus2d_reference(params: np.ndarray, size) -> np.ndarray:
    """Pure numpy reference mirroring the PyTorch forward."""
    H, W = size
    max_size = max(H, W)
    x = np.clip(params[:, 0:1], -1, 1)[:, :, None, None]        # (B,1,1,1)
    y = np.clip(params[:, 1:2], -1, 1)[:, :, None, None]
    std = np.clip(params[:, 2:3], 0, 1)[:, :, None, None]
    gx = (np.arange(H) / max(H - 1, 1) * 2 - 1).reshape(1, 1, H, 1)
    gy = (np.arange(W) / max(W - 1, 1) * 2 - 1).reshape(1, 1, 1, W)
    std_x = (1 + max_size * std) / H
    std_y = (1 + max_size * std) / W
    return np.exp(-((gx - x) ** 2 / (2 * std_x ** 2) + (gy - y) ** 2 / (2 * std_y ** 2)))


if __name__ == "__main__":
    key = jax.random.PRNGKey(0)

    # Case 1: the module's canonical small shape (B=2, size 16x16); values outside the
    # valid ranges exercise the clips.
    size1 = (16, 16)
    B1 = 2
    k1, k2 = jax.random.split(key)
    params1 = jax.random.uniform(k1, (B1, 3), dtype=jnp.float32, minval=-1.5, maxval=1.5)
    out1 = jax.block_until_ready(gaus2d_pallas(params1, size1))
    ref1 = gaus2d_reference(np.asarray(params1), size1)
    assert out1.shape == (B1, 1, size1[0], size1[1]), out1.shape
    assert np.allclose(np.asarray(out1), ref1, atol=1e-5, rtol=1e-5), "mismatch (case 1)"

    # Case 2: non-square size with odd dims / batch to exercise the non-128 lane path.
    size2 = (24, 136)
    B2 = 3
    params2 = jax.random.uniform(k2, (B2, 3), dtype=jnp.float32, minval=-1.5, maxval=1.5)
    out2 = jax.block_until_ready(gaus2d_pallas(params2, size2))
    ref2 = gaus2d_reference(np.asarray(params2), size2)
    assert out2.shape == (B2, 1, size2[0], size2[1]), out2.shape
    assert np.allclose(np.asarray(out2), ref2, atol=1e-5, rtol=1e-5), "mismatch (case 2)"

    print("KERNEL_OK")
</pallas_src>

<mosaic_0001>
module attributes {stable_mosaic.version = 11 : i64} {
  func.func @kernel(%arg0: i32, %arg1: i32, %arg2: memref<2x3xf32, #tpu.memory_space<vmem>>, %arg3: memref<2x16x16xf32, #tpu.memory_space<vmem>>) attributes {dimension_semantics = [#tpu.dimension_semantics<parallel>, #tpu.dimension_semantics<parallel>], iteration_bounds = array<i64: 1, 1>, scalar_prefetch = 0 : i64, scratch_operands = 0 : i64, tpu.core_type = #tpu.core_type<tc>, window_params = [{transform_indices = @transform_0, window_bounds = array<i64: 2, 3>}, {transform_indices = @transform_1, window_bounds = array<i64: 2, 16, 16>}]} {
    %c0 = arith.constant 0 : index
    %c0_0 = arith.constant 0 : index
    %0 = vector.load %arg2[%c0, %c0_0] : memref<2x3xf32, #tpu.memory_space<vmem>>, vector<2x3xf32>
    %1 = vector.extract_strided_slice %0 {offsets = [0, 0], sizes = [2, 1], strides = [1, 1]} : vector<2x3xf32> to vector<2x1xf32>
    %cst = arith.constant -1.000000e+00 : f32
    %cst_1 = arith.constant 1.000000e+00 : f32
    %2 = vector.broadcast %cst : f32 to vector<2x1xf32>
    %3 = arith.maximumf %2, %1 : vector<2x1xf32>
    %4 = vector.broadcast %cst_1 : f32 to vector<2x1xf32>
    %5 = arith.minimumf %4, %3 : vector<2x1xf32>
    %6 = vector.extract_strided_slice %0 {offsets = [0, 1], sizes = [2, 1], strides = [1, 1]} : vector<2x3xf32> to vector<2x1xf32>
    %cst_2 = arith.constant -1.000000e+00 : f32
    %cst_3 = arith.constant 1.000000e+00 : f32
    %7 = vector.broadcast %cst_2 : f32 to vector<2x1xf32>
    %8 = arith.maximumf %7, %6 : vector<2x1xf32>
    %9 = vector.broadcast %cst_3 : f32 to vector<2x1xf32>
    %10 = arith.minimumf %9, %8 : vector<2x1xf32>
    %11 = vector.extract_strided_slice %0 {offsets = [0, 2], sizes = [2, 1], strides = [1, 1]} : vector<2x3xf32> to vector<2x1xf32>
    %cst_4 = arith.constant 0.000000e+00 : f32
    %cst_5 = arith.constant 1.000000e+00 : f32
    %12 = vector.broadcast %cst_4 : f32 to vector<2x1xf32>
    %13 = arith.maximumf %12, %11 : vector<2x1xf32>
    %14 = vector.broadcast %cst_5 : f32 to vector<2x1xf32>
    %15 = arith.minimumf %14, %13 : vector<2x1xf32>
    %cst_6 = arith.constant 1.600000e+01 : f32
    %16 = vector.broadcast %cst_6 : f32 to vector<2x1xf32>
    %17 = arith.mulf %16, %15 : vector<2x1xf32>
    %cst_7 = arith.constant 1.000000e+00 : f32
    %18 = vector.broadcast %cst_7 : f32 to vector<2x1xf32>
    %19 = arith.addf %18, %17 : vector<2x1xf32>
    %cst_8 = arith.constant 2.000000e+00 : f32
    %20 = vector.broadcast %cst_8 : f32 to vector<2x1xf32>
    %21 = arith.mulf %20, %19 : vector<2x1xf32>
    %22 = arith.mulf %21, %19 : vector<2x1xf32>
    %23 = tpu.reciprocal %22 : vector<2x1xf32> -> vector<2x1xf32>
    %cst_9 = arith.constant 2.560000e+02 : f32
    %24 = vector.broadcast %cst_9 : f32 to vector<2x1xf32>
    %25 = arith.mulf %23, %24 : vector<2x1xf32>
    %26 = vector.shape_cast %25 : vector<2x1xf32> to vector<2x1x1xf32>
    %cst_10 = arith.constant 2.560000e+02 : f32
    %27 = vector.broadcast %cst_10 : f32 to vector<2x1xf32>
    %28 = arith.mulf %23, %27 : vector<2x1xf32>
    %29 = vector.shape_cast %28 : vector<2x1xf32> to vector<2x1x1xf32>
    %c16_i32 = arith.constant 16 : i32
    %30 = arith.muli %arg1, %c16_i32 : i32
    %31 = arith.sitofp %30 : i32 to f32
    %32 = tpu.iota {dimensions = array<i32: 1>} : vector<1x16x1xi32>
    %33 = arith.sitofp %32 : vector<1x16x1xi32> to vector<1x16x1xf32>
    %34 = vector.broadcast %31 : f32 to vector<1x16x1xf32>
    %35 = arith.addf %33, %34 : vector<1x16x1xf32>
    %cst_11 = arith.constant 0.13333334 : f32
    %36 = vector.broadcast %cst_11 : f32 to vector<1x16x1xf32>
    %37 = arith.mulf %35, %36 : vector<1x16x1xf32>
    %cst_12 = arith.constant 1.000000e+00 : f32
    %38 = vector.broadcast %cst_12 : f32 to vector<1x16x1xf32>
    %39 = arith.subf %37, %38 : vector<1x16x1xf32>
    %40 = vector.shape_cast %5 : vector<2x1xf32> to vector<2x1x1xf32>
    %41 = vector.broadcast %39 : vector<1x16x1xf32> to vector<2x16x1xf32>
    %42 = vector.broadcast %40 : vector<2x1x1xf32> to vector<2x16x1xf32>
    %43 = arith.subf %41, %42 : vector<2x16x1xf32>
    %44 = arith.mulf %43, %43 : vector<2x16x1xf32>
    %cst_13 = arith.constant 0.000000e+00 : f32
    %45 = vector.broadcast %cst_13 : f32 to vector<2x16x1xf32>
    %46 = arith.subf %45, %44 : vector<2x16x1xf32>
    %47 = vector.broadcast %26 : vector<2x1x1xf32> to vector<2x16x1xf32>
    %48 = arith.mulf %46, %47 : vector<2x16x1xf32>
    %49 = math.exp %48 : vector<2x16x1xf32>
    %50 = tpu.iota {dimensions = array<i32: 2>} : vector<1x1x16xi32>
    %51 = arith.sitofp %50 : vector<1x1x16xi32> to vector<1x1x16xf32>
    %cst_14 = arith.constant 0.13333334 : f32
    %52 = vector.broadcast %cst_14 : f32 to vector<1x1x16xf32>
    %53 = arith.mulf %51, %52 : vector<1x1x16xf32>
    %cst_15 = arith.constant 1.000000e+00 : f32
    %54 = vector.broadcast %cst_15 : f32 to vector<1x1x16xf32>
    %55 = arith.subf %53, %54 : vector<1x1x16xf32>
    %56 = vector.shape_cast %10 : vector<2x1xf32> to vector<2x1x1xf32>
    %57 = vector.broadcast %55 : vector<1x1x16xf32> to vector<2x1x16xf32>
    %58 = vector.broadcast %56 : vector<2x1x1xf32> to vector<2x1x16xf32>
    %59 = arith.subf %57, %58 : vector<2x1x16xf32>
    %60 = arith.mulf %59, %59 : vector<2x1x16xf32>
    %cst_16 = arith.constant 0.000000e+00 : f32
    %61 = vector.broadcast %cst_16 : f32 to vector<2x1x16xf32>
    %62 = arith.subf %61, %60 : vector<2x1x16xf32>
    %63 = vector.broadcast %29 : vector<2x1x1xf32> to vector<2x1x16xf32>
    %64 = arith.mulf %62, %63 : vector<2x1x16xf32>
    %65 = math.exp %64 : vector<2x1x16xf32>
    %66 = vector.broadcast %49 : vector<2x16x1xf32> to vector<2x16x16xf32>
    %67 = vector.broadcast %65 : vector<2x1x16xf32> to vector<2x16x16xf32>
    %68 = arith.mulf %66, %67 : vector<2x16x16xf32>
    %c0_17 = arith.constant 0 : index
    %c0_18 = arith.constant 0 : index
    %c0_19 = arith.constant 0 : index
    %69 = vector.load %arg3[%c0_17, %c0_18, %c0_19] : memref<2x16x16xf32, #tpu.memory_space<vmem>>, vector<2x16x16xf32>
    tpu.vector_store %arg3[%c0_17, %c0_18, %c0_19], %68 {strides = array<i32>} : memref<2x16x16xf32, #tpu.memory_space<vmem>>, vector<2x16x16xf32>,
    return
  }
  func.func @transform_0(%arg0: i32, %arg1: i32) -> (i32, i32) {
    %c0_i32 = arith.constant 0 : i32
    %c0_i32_0 = arith.constant 0 : i32
    return %arg0, %c0_i32 : i32, i32
  }
  func.func @transform_1(%arg0: i32, %arg1: i32) -> (i32, i32, i32) {
    %c0_i32 = arith.constant 0 : i32
    %c0_i32_0 = arith.constant 0 : i32
    return %arg0, %arg1, %c0_i32 : i32, i32, i32
  }
}

</mosaic_0001>

<llo_original>
// kernel: tpu_custom_call.1
$region0: #{tpu_custom_call.1}
  #allocation0 [shape = 'u32[]', space=smem, size = 0x4, offset = 0x4, fixed_abs, tag = 'smem constant byte address 0x4 - core index']
  #allocation1 [shape = 'u32[144,128]{1,0:T(1,128)}', space=vmem, size = 0x12000, scoped, tag = 'internal scratch']
  %s0 = inlined_call_operand.hbm [shape: f32[2,3], index: 0, kind: input, shape index: {}]
  %s1 = inlined_call_operand.hbm [shape: f32[2,16,16], index: 1, kind: output, shape index: {}]
  %s2 = sld [smem:[#allocation0]]
  $region18: #{tpu_custom_call.1} parent=0
    _
  %s4 = ssub.s32 1, %s2
  %s5 = scalar_select 0, %s4, %s2
  $region1: #{tpu_custom_call.1} parent=0
    #allocation2 [shape = 'u8[1024]{0}', space=vmem, size = 0x400, scoped, tag = 'input window, operand 0, single buffered']
    #allocation3 [shape = 's32[1]{0}', space=sflag, size = 0x4, scoped, tag = 'scoped memory for tpu_custom_call.1']
    #allocation4 [shape = 's32[1]{0}', space=sflag, size = 0x4, scoped, tag = 'scoped memory for tpu_custom_call.1']
    #allocation5 [shape = 'u8[16384]{0}', space=vmem, size = 0x4000, scoped, tag = 'output window, operand 0, single buffered']
    %6 = vsyncpa [#allocation3], 0
    %7 = vsyncpa [#allocation4], 0
    // Predicated region
    $region2: #{tpu_custom_call.1} parent=1 // pred_check
      _
    $region3: #{tpu_custom_call.1} parent=1 // pred_check_branch
      %9 = sbr.rel (0) target = $region5
    $region4: #{tpu_custom_call.1} parent=1 // pred_region
      %s11 = ssub.s32 32, 32
      %12 = vsyncadd [#allocation3], %s11
      %s14 = sshll.u32 [#allocation2], 4
      %s15 = int_to_ptr.vmem [resolvable:$true] %s14
      %17 = dma.hbm_to_vmem [thread:$0]  %s0, 32, %s15, [#allocation3]
    $region5: #{tpu_custom_call.1} parent=1 // pred_fallthru
      _
    // Predicated region
    $region6: #{tpu_custom_call.1} parent=1 // pred_check
      _
    $region7: #{tpu_custom_call.1} parent=1 // pred_check_branch
      %19 = sbr.rel (0) target = $region9
    $region8: #{tpu_custom_call.1} parent=1 // pred_region
      %20 = dma.done [#allocation3], 32
    $region9: #{tpu_custom_call.1} parent=1 // pred_fallthru
      _
    %v21 = vld [vmem:[#allocation2] sm:$0x3]
    %v22 = vmax.f32 %v21, -1.0
    %v23 = vmin.f32 %v22, 1.0
    %v24 = vmax.f32 %v21, 0.0
    %v25 = vmin.f32 %v24, 1.0
    %v26 = vmul.f32 %v25, 16.0
    %v27 = vadd.f32 %v26, 1.0
    %v28 = vmul.f32 %v27, 2.0
    %v29 = vmul.f32 %v28, %v27
    %v30 = vrcp.pop %v29
    %v31 = vmul.f32 %v30, 256.0
    %v34 = vunpack.c.l.s4 1966171168
    %v35 = vunpack.c.0.s8 %v34
    %v36 = vlaneseq
    %v37 = vshrl.u32 %v36, 7
    %v38 = vsub.s32 %v35, %v37
    %v39 = vrot.slane %v31, %v38
    %v40 = vcombine.high %v39, %v39
    %v42 = vunpack.c.l.s4 1966171168
    %v43 = vunpack.c.0.s8 %v42
    %v44 = vlaneseq
    %v45 = vshrl.u32 %v44, 7
    %v46 = vsub.s32 %v43, %v45
    %v47 = vrot.slane %v39, %v46
    %v49 = vunpack.c.l.s4 1966171168
    %v50 = vunpack.c.0.s8 %v49
    %v51 = vlaneseq
    %v52 = vshrl.u32 %v51, 7
    %v53 = vsub.s32 %v50, %v52
    %v54 = vrot.slane %v40, %v53
    %s55 = smul.u32 0, 16
    %s56 = scvt.s32.f32 %s55
    %v57 = vlaneseq
    %v58 = vshrl.u32 %v57, 7
    %v59 = vadd.s32 %v58, 8
    %v60 = vcvt.s32.f32 %v58
    %v61 = vcvt.s32.f32 %v59
    %v62 = vstv %s56
    %v63 = vadd.f32 %v60, %v62
    %v64 = vadd.f32 %v61, %v62
    %v65 = vmul.f32 %v63, 0.13333334
    %v66 = vmul.f32 %v64, 0.13333334
    %v67 = vsub.f32 %v65, 1.0
    %v68 = vsub.f32 %v66, 1.0
    %v71 = vunpack.c.l.s4 1966171168
    %v72 = vunpack.c.0.s8 %v71
    %v73 = vlaneseq
    %v74 = vshrl.u32 %v73, 7
    %v75 = vsub.s32 %v72, %v74
    %v76 = vrot.slane %v23, %v75
    %v77 = vcombine.high %v76, %v76
    %v79 = vunpack.c.l.s4 1966171168
    %v80 = vunpack.c.0.s8 %v79
    %v81 = vlaneseq
    %v82 = vshrl.u32 %v81, 7
    %v83 = vsub.s32 %v80, %v82
    %v84 = vrot.slane %v76, %v83
    %v86 = vunpack.c.l.s4 1966171168
    %v87 = vunpack.c.0.s8 %v86
    %v88 = vlaneseq
    %v89 = vshrl.u32 %v88, 7
    %v90 = vsub.s32 %v87, %v89
    %v91 = vrot.slane %v77, %v90
    %v92 = vlaneseq
    %v93 = vshrl.u32 %v92, 7
    %v94 = vsub.s32 0, %v93
    %v95 = vrot.slane %v84, %v94
    %v96 = vlaneseq
    %v97 = vshrl.u32 %v96, 7
    %v98 = vsub.s32 0, %v97
    %v99 = vrot.slane %v91, %v98
    %v102 = vsub.f32 %v67, %v95
    %v103 = vsub.f32 %v68, %v95
    %v104 = vsub.f32 %v67, %v99
    %v105 = vsub.f32 %v68, %v99
    %v106 = vmul.f32 %v102, %v102
    %v107 = vmul.f32 %v103, %v103
    %v108 = vmul.f32 %v104, %v104
    %v109 = vmul.f32 %v105, %v105
    %v110 = vsub.f32 0.0, %v106
    %v111 = vsub.f32 0.0, %v107
    %v112 = vsub.f32 0.0, %v108
    %v113 = vsub.f32 0.0, %v109
    %v114 = vlaneseq
    %v115 = vshrl.u32 %v114, 7
    %v116 = vsub.s32 0, %v115
    %v117 = vrot.slane %v47, %v116
    %v118 = vlaneseq
    %v119 = vshrl.u32 %v118, 7
    %v120 = vsub.s32 0, %v119
    %v121 = vrot.slane %v54, %v120
    %122 = vrot.lane.b32.xlu0 %v117, 126
    %v123 = vpop.permute.xlu0 %122
    %124 = vrot.lane.b32.xlu0 %v121, 126
    %v125 = vpop.permute.xlu0 %124
    %v128 = vmul.f32 %v110, %v123
    %v129 = vmul.f32 %v111, %v123
    %v130 = vmul.f32 %v112, %v125
    %v131 = vmul.f32 %v113, %v125
    %v132 = vmul.f32 %v128, 1.442695
    %v133 = vpow.pop %v132
    %v134 = vmul.f32 %v129, 1.442695
    %v135 = vpow.pop %v134
    %v136 = vmul.f32 %v130, 1.442695
    %v137 = vpow.pop %v136
    %v138 = vmul.f32 %v131, 1.442695
    %v139 = vpow.pop %v138
    %v140 = vlaneseq
    %v141 = vand.u32 %v140, 127
    %v142 = vcvt.s32.f32 %v141
    %v143 = vmul.f32 %v142, 0.13333334
    %v144 = vsub.f32 %v143, 1.0
    %145 = vset.pattern.permute.xlu0 1
    %146 = vperm.xlu0 %145, %v84
    %v147 = vpop.permute.xlu0 %146
    %v149 = vlaneseq
    %v150 = vshrl.u32 %v149, 7
    %v151 = vsub.s32 0, %v150
    %v152 = vrot.slane %v147, %v151
    %153 = vset.pattern.permute.xlu0 1
    %154 = vperm.xlu0 %153, %v91
    %v155 = vpop.permute.xlu0 %154
    %v157 = vlaneseq
    %v158 = vshrl.u32 %v157, 7
    %v159 = vsub.s32 0, %v158
    %v160 = vrot.slane %v155, %v159
    %v161 = vsub.f32 %v144, %v152
    %v162 = vsub.f32 %v144, %v160
    %v163 = vmul.f32 %v161, %v161
    %v164 = vmul.f32 %v162, %v162
    %v165 = vsub.f32 0.0, %v163
    %v166 = vsub.f32 0.0, %v164
    %167 = vset.pattern.permute.xlu0 2
    %168 = vperm.xlu0 %167, %v47
    %v169 = vpop.permute.xlu0 %168
    %v171 = vlaneseq
    %v172 = vshrl.u32 %v171, 7
    %v173 = vsub.s32 0, %v172
    %v174 = vrot.slane %v169, %v173
    %175 = vset.pattern.permute.xlu0 2
    %176 = vperm.xlu0 %175, %v54
    %v177 = vpop.permute.xlu0 %176
    %v179 = vlaneseq
    %v180 = vshrl.u32 %v179, 7
    %v181 = vsub.s32 0, %v180
    %v182 = vrot.slane %v177, %v181
    %v183 = vmul.f32 %v165, %v174
    %v184 = vmul.f32 %v166, %v182
    %v185 = vmul.f32 %v183, 1.442695
    %v186 = vpow.pop %v185
    %v187 = vmul.f32 %v184, 1.442695
    %v188 = vpow.pop %v187
    %190 = vset.pattern.permute.xlu0 0
    %191 = vperm.xlu0 %190, %v133
    %v192 = vpop.permute.xlu0 %191
    %195 = vset.pattern.permute.xlu0 0
    %196 = vperm.xlu0 %195, %v135
    %v197 = vpop.permute.xlu0 %196
    %200 = vset.pattern.permute.xlu0 0
    %201 = vperm.xlu0 %200, %v137
    %v202 = vpop.permute.xlu0 %201
    %205 = vset.pattern.permute.xlu0 0
    %206 = vperm.xlu0 %205, %v139
    %v207 = vpop.permute.xlu0 %206
    %v209 = vmul.f32 %v192, %v186
    %v210 = vmul.f32 %v197, %v186
    %v211 = vmul.f32 %v202, %v188
    %v212 = vmul.f32 %v207, %v188
    %vm213 = vcmask 130048
    %214 = vst.msk [vmem:[#allocation5] sm:$0xff] %vm213, %v209
    %215 = vst.msk [vmem:[#allocation5 + $0x8] sm:$0xff] %vm213, %v210
    %216 = vst.msk [vmem:[#allocation5 + $0x10] sm:$0xff] %vm213, %v211
    %217 = vst.msk [vmem:[#allocation5 + $0x18] sm:$0xff] %vm213, %v212
    // Predicated region
    $region10: #{tpu_custom_call.1} parent=1 // pred_check
      _
    $region11: #{tpu_custom_call.1} parent=1 // pred_check_branch
      %219 = sbr.rel (0) target = $region13
    $region12: #{tpu_custom_call.1} parent=1 // pred_region
      %s221 = ssub.s32 512, 512
      %222 = vsyncadd [#allocation4], %s221
      %s223 = sshll.u32 [#allocation5], 4
      %s224 = int_to_ptr.vmem [resolvable:$true] %s223
      %229 = dma.vmem_to_hbm [thread:$0]  %s224, 512, %s1, [#allocation4], 128, 128, 8
    $region13: #{tpu_custom_call.1} parent=1 // pred_fallthru
      _
    // Predicated region
    $region14: #{tpu_custom_call.1} parent=1 // pred_check
      _
    $region15: #{tpu_custom_call.1} parent=1 // pred_check_branch
      %231 = sbr.rel (0) target = $region17
    $region16: #{tpu_custom_call.1} parent=1 // pred_region
      %232 = dma.done [#allocation4], 512
    $region17: #{tpu_custom_call.1} parent=1 // pred_fallthru
      _
    %233 = vsyncpa [#allocation3], 1
    %234 = vsyncpa [#allocation4], 1

</llo_original>
